<compile_context>
chip_gen: v7x
topology: tpu7x:2x2x1
jax: 0.10.0
libtpu: 0.0.40
codegen_flags: <defaults>
</compile_context>

<pallas_src>
import jax
import jax.numpy as jnp
import numpy as np
from jax.experimental import pallas as pl
from jax.experimental.pallas import tpu as pltpu

# Module configuration (small synthetic shapes).
RES_CHANNELS = 8
SKIP_CHANNELS = 16
KERNEL_SIZE = 3
DILATION = 2
BN_EPS = 1e-5

MXU_DTYPE = jnp.bfloat16   # matmul-operand dtype (accumulation stays f32)


def _gated_block_kernel(x_ref, bn_ref, wg_ref, bg_ref, wo_ref, bo_ref,
                        res_ref, skip_ref):
    # x_ref: (C, T) f32            bn_ref: (C, 2)  [scale | offset]
    # wg_ref: (2C, K*C) bf16       bg_ref: (2C, 1) f32
    # wo_ref: (C+S, C) bf16        bo_ref: (C+S, 1) f32
    # res_ref: (C, T)              skip_ref: (S, T)
    C, T = x_ref.shape

    # BatchNorm1d (eval mode), folded to one FMA per element.
    xn = x_ref[...] * bn_ref[:, 0:1] + bn_ref[:, 1:2]                  # (C, T) f32

    # im2col: stack the K causally-shifted (left-zero-padded) copies along the
    # channel (sublane) axis.  Shift = lane rotate (XLU) + iota mask (VPU).
    col_ids = jax.lax.broadcasted_iota(jnp.int32, (C, T), 1)
    taps = []
    for j in range(KERNEL_SIZE):
        shift = (KERNEL_SIZE - 1 - j) * DILATION
        if shift == 0:
            taps.append(xn)
        else:
            xs = pltpu.roll(xn, shift=shift, axis=1)                   # lane rotate
            taps.append(jnp.where(col_ids >= shift, xs, 0.0))          # causal zero fill
    x_im2col = jnp.concatenate(taps, axis=0)                           # (K*C, T)

    # Fused tanh+sigmoid dilated conv: one bf16 MXU matmul, f32 accumulate.
    pre = jnp.dot(wg_ref[...], x_im2col.astype(MXU_DTYPE),
                  preferred_element_type=jnp.float32) + bg_ref[...]    # (2C, T)
    gpc = jnp.tanh(pre[:C]) * jax.nn.sigmoid(pre[C:])                  # (C, T) f32

    # Fused res+skip 1x1 convs: one bf16 MXU matmul, f32 accumulate.
    out = jnp.dot(wo_ref[...], gpc.astype(MXU_DTYPE),
                  preferred_element_type=jnp.float32) + bo_ref[...]    # (C+S, T)

    res_ref[...] = (out[:C] + xn).astype(res_ref.dtype)
    skip_ref[...] = out[C:].astype(skip_ref.dtype)


def gated_residual_block_1d(x_ncw, params):
    """x_ncw: (B, C, T) float32 (PyTorch NCW).  Returns (res (B,C,T), skip (B,S,T))."""
    B, C, T = x_ncw.shape
    S = params["w_skip"].shape[0]
    K = KERNEL_SIZE

    # ---- host-side parameter folding / fusion (tiny, runs once) ----
    # BN (eval) folded to per-channel scale/offset, packed as (C, 2).
    scale = params["bn_gamma"] * jax.lax.rsqrt(params["bn_var"] + BN_EPS)
    offset = params["bn_beta"] - params["bn_mean"] * scale
    bn = jnp.stack([scale, offset], axis=1)                            # (C, 2)

    # Fuse tanh & sigmoid dilated-conv weights per tap and flatten for im2col.
    # Column blocks ordered by tap j (oldest shift first) to match the kernel.
    wt, ws = params["w_tanh"], params["w_sigmoid"]                     # (C, C, K)
    w_gate = jnp.concatenate(
        [jnp.concatenate([wt[:, :, j] for j in range(K)], axis=1),
         jnp.concatenate([ws[:, :, j] for j in range(K)], axis=1)],
        axis=0).astype(MXU_DTYPE)                                      # (2C, K*C)
    b_gate = jnp.concatenate([params["b_tanh"], params["b_sigmoid"]])[:, None]  # (2C, 1)

    # Fuse conv_res / conv_skip (1x1) into one (C+S, C) matmul.
    w_out = jnp.concatenate([params["w_res"][:, :, 0],
                             params["w_skip"][:, :, 0]], axis=0).astype(MXU_DTYPE)
    b_out = jnp.concatenate([params["b_res"], params["b_skip"]])[:, None]       # (C+S, 1)

    def full(arr):
        return pl.BlockSpec(arr.shape, lambda b, _n=arr.ndim: (0,) * _n)

    res, skip = pl.pallas_call(
        _gated_block_kernel,
        out_shape=(jax.ShapeDtypeStruct((B, C, T), x_ncw.dtype),
                   jax.ShapeDtypeStruct((B, S, T), x_ncw.dtype)),
        grid_spec=pltpu.PrefetchScalarGridSpec(
            num_scalar_prefetch=0,
            grid=(B,),
            in_specs=[
                pl.BlockSpec((pl.Squeezed(), C, T), lambda b: (b, 0, 0)),  # x (NCW)
                full(bn), full(w_gate), full(b_gate), full(w_out), full(b_out),
            ],
            out_specs=[
                pl.BlockSpec((pl.Squeezed(), C, T), lambda b: (b, 0, 0)),  # res (NCW)
                pl.BlockSpec((pl.Squeezed(), S, T), lambda b: (b, 0, 0)),  # skip (NCW)
            ],
        ),
        compiler_params=pltpu.CompilerParams(dimension_semantics=("parallel",)),
    )(x_ncw, bn, w_gate, b_gate, w_out, b_out)

    return res, skip


def _reference_forward(x_ncw, params):
    """Pure-JAX reference (PyTorch forward, eval-mode BN).  The convolution
    operands are rounded to bf16 (accumulation f32) to mirror the kernel's
    bf16-MXU-operand choice, so the comparison tolerance can stay tight."""
    scale = params["bn_gamma"] * jax.lax.rsqrt(params["bn_var"] + BN_EPS)
    offset = params["bn_beta"] - params["bn_mean"] * scale
    xn = x_ncw * scale[None, :, None] + offset[None, :, None]

    rnd = lambda a: a.astype(jnp.bfloat16).astype(jnp.float32)
    dn = ("NCH", "OIH", "NCH")
    prec = jax.lax.Precision.HIGHEST

    pad = (KERNEL_SIZE - 1) * DILATION
    xpad = jnp.pad(rnd(xn), ((0, 0), (0, 0), (pad, 0)))
    pre_t = jax.lax.conv_general_dilated(
        xpad, rnd(params["w_tanh"]), (1,), "VALID", rhs_dilation=(DILATION,),
        dimension_numbers=dn, precision=prec) + params["b_tanh"][None, :, None]
    pre_s = jax.lax.conv_general_dilated(
        xpad, rnd(params["w_sigmoid"]), (1,), "VALID", rhs_dilation=(DILATION,),
        dimension_numbers=dn, precision=prec) + params["b_sigmoid"][None, :, None]
    gpc = jnp.tanh(pre_t) * jax.nn.sigmoid(pre_s)

    res = jax.lax.conv_general_dilated(
        rnd(gpc), rnd(params["w_res"]), (1,), "VALID",
        dimension_numbers=dn, precision=prec) + params["b_res"][None, :, None] + xn
    skip = jax.lax.conv_general_dilated(
        rnd(gpc), rnd(params["w_skip"]), (1,), "VALID",
        dimension_numbers=dn, precision=prec) + params["b_skip"][None, :, None]
    return res, skip


if __name__ == "__main__":
    B, C, T, S, K = 2, RES_CHANNELS, 128, SKIP_CHANNELS, KERNEL_SIZE

    keys = jax.random.split(jax.random.PRNGKey(0), 13)
    params = {
        "bn_gamma":  1.0 + 0.1 * jax.random.normal(keys[0], (C,), jnp.float32),
        "bn_beta":   0.1 * jax.random.normal(keys[1], (C,), jnp.float32),
        "bn_mean":   0.1 * jax.random.normal(keys[2], (C,), jnp.float32),
        "bn_var":    jax.random.uniform(keys[3], (C,), jnp.float32, 0.5, 1.5),
        "w_tanh":    0.3 * jax.random.normal(keys[4], (C, C, K), jnp.float32),
        "b_tanh":    0.1 * jax.random.normal(keys[5], (C,), jnp.float32),
        "w_sigmoid": 0.3 * jax.random.normal(keys[6], (C, C, K), jnp.float32),
        "b_sigmoid": 0.1 * jax.random.normal(keys[7], (C,), jnp.float32),
        "w_res":     0.3 * jax.random.normal(keys[8], (C, C, 1), jnp.float32),
        "b_res":     0.1 * jax.random.normal(keys[9], (C,), jnp.float32),
        "w_skip":    0.3 * jax.random.normal(keys[10], (S, C, 1), jnp.float32),
        "b_skip":    0.1 * jax.random.normal(keys[11], (S,), jnp.float32),
    }
    x = jax.random.normal(keys[12], (B, C, T), jnp.float32)   # PyTorch NCW layout

    res, skip = gated_residual_block_1d(x, params)
    jax.block_until_ready((res, skip))

    res_ref, skip_ref = _reference_forward(x, params)
    np.testing.assert_allclose(np.asarray(res), np.asarray(res_ref), atol=1e-4, rtol=1e-4)
    np.testing.assert_allclose(np.asarray(skip), np.asarray(skip_ref), atol=1e-4, rtol=1e-4)

    print("KERNEL_OK")
</pallas_src>

<mosaic_0001>
module attributes {stable_mosaic.version = 11 : i64} {
  func.func @_gated_block_kernel(%arg0: i32, %arg1: memref<1x8x128xf32, #tpu.memory_space<vmem>>, %arg2: memref<8x2xf32, #tpu.memory_space<vmem>>, %arg3: memref<16x24xbf16, #tpu.memory_space<vmem>>, %arg4: memref<16x1xf32, #tpu.memory_space<vmem>>, %arg5: memref<24x8xbf16, #tpu.memory_space<vmem>>, %arg6: memref<24x1xf32, #tpu.memory_space<vmem>>, %arg7: memref<1x8x128xf32, #tpu.memory_space<vmem>>, %arg8: memref<1x16x128xf32, #tpu.memory_space<vmem>>) attributes {dimension_semantics = [#tpu.dimension_semantics<parallel>], iteration_bounds = array<i64: 2>, scalar_prefetch = 0 : i64, scratch_operands = 0 : i64, tpu.core_type = #tpu.core_type<tc>, window_params = [{transform_indices = @transform_0, window_bounds = array<i64: 1, 8, 128>}, {pipeline_mode = #tpu.pipeline_mode<synchronous>, transform_indices = @transform_1, window_bounds = array<i64: 8, 2>}, {pipeline_mode = #tpu.pipeline_mode<synchronous>, transform_indices = @transform_2, window_bounds = array<i64: 16, 24>}, {pipeline_mode = #tpu.pipeline_mode<synchronous>, transform_indices = @transform_3, window_bounds = array<i64: 16, 1>}, {pipeline_mode = #tpu.pipeline_mode<synchronous>, transform_indices = @transform_4, window_bounds = array<i64: 24, 8>}, {pipeline_mode = #tpu.pipeline_mode<synchronous>, transform_indices = @transform_5, window_bounds = array<i64: 24, 1>}, {transform_indices = @transform_6, window_bounds = array<i64: 1, 8, 128>}, {transform_indices = @transform_7, window_bounds = array<i64: 1, 16, 128>}]} {
    %c0 = arith.constant 0 : index
    %c0_0 = arith.constant 0 : index
    %c0_1 = arith.constant 0 : index
    %0 = vector.load %arg1[%c0, %c0_0, %c0_1] : memref<1x8x128xf32, #tpu.memory_space<vmem>>, vector<1x8x128xf32>
    %1 = vector.shape_cast %0 : vector<1x8x128xf32> to vector<8x128xf32>
    %c0_2 = arith.constant 0 : index
    %c0_3 = arith.constant 0 : index
    %2 = vector.load %arg2[%c0_2, %c0_3] : memref<8x2xf32, #tpu.memory_space<vmem>>, vector<8x1xf32>
    %3 = vector.broadcast %2 : vector<8x1xf32> to vector<8x128xf32>
    %4 = arith.mulf %1, %3 : vector<8x128xf32>
    %c0_4 = arith.constant 0 : index
    %c1 = arith.constant 1 : index
    %5 = vector.load %arg2[%c0_4, %c1] : memref<8x2xf32, #tpu.memory_space<vmem>>, vector<8x1xf32>
    %6 = vector.broadcast %5 : vector<8x1xf32> to vector<8x128xf32>
    %7 = arith.addf %4, %6 : vector<8x128xf32>
    %8 = tpu.iota {dimensions = array<i32: 1>} : vector<8x128xi32>
    %c4_i32 = arith.constant 4 : i32
    %9 = tpu.dynamic_rotate %7 by %c4_i32 dim 1 : vector<8x128xf32>, i32 -> vector<8x128xf32>
    %c4_i32_5 = arith.constant 4 : i32
    %10 = vector.broadcast %c4_i32_5 : i32 to vector<8x128xi32>
    %11 = arith.cmpi sge, %8, %10 : vector<8x128xi32>
    %cst = arith.constant 0.000000e+00 : f32
    %12 = vector.broadcast %cst : f32 to vector<8x128xf32>
    %13 = arith.select %11, %9, %12 : vector<8x128xi1>, vector<8x128xf32>
    %c2_i32 = arith.constant 2 : i32
    %14 = tpu.dynamic_rotate %7 by %c2_i32 dim 1 : vector<8x128xf32>, i32 -> vector<8x128xf32>
    %c2_i32_6 = arith.constant 2 : i32
    %15 = vector.broadcast %c2_i32_6 : i32 to vector<8x128xi32>
    %16 = arith.cmpi sge, %8, %15 : vector<8x128xi32>
    %cst_7 = arith.constant 0.000000e+00 : f32
    %17 = vector.broadcast %cst_7 : f32 to vector<8x128xf32>
    %18 = arith.select %16, %14, %17 : vector<8x128xi1>, vector<8x128xf32>
    %19 = tpu.concatenate %13, %18, %7 in 0 : vector<8x128xf32>, vector<8x128xf32>, vector<8x128xf32> -> vector<24x128xf32>
    %c0_8 = arith.constant 0 : index
    %c0_9 = arith.constant 0 : index
    %20 = vector.load %arg3[%c0_8, %c0_9] : memref<16x24xbf16, #tpu.memory_space<vmem>>, vector<16x24xbf16>
    %21 = arith.truncf %19 : vector<24x128xf32> to vector<24x128xbf16>
    %cst_10 = arith.constant dense<0.000000e+00> : vector<16x128xf32>
    %22 = tpu.matmul %20, %21, %cst_10 {dimension_numbers = #tpu.dot_dimension_numbers<[1], [0], [0], [1], [0, 0, 1, 1], [], []>} : vector<16x24xbf16>, vector<24x128xbf16>, vector<16x128xf32> -> vector<16x128xf32>
    %c0_11 = arith.constant 0 : index
    %c0_12 = arith.constant 0 : index
    %23 = vector.load %arg4[%c0_11, %c0_12] : memref<16x1xf32, #tpu.memory_space<vmem>>, vector<16x1xf32>
    %24 = vector.broadcast %23 : vector<16x1xf32> to vector<16x128xf32>
    %25 = arith.addf %22, %24 : vector<16x128xf32>
    %26 = vector.extract_strided_slice %25 {offsets = [0, 0], sizes = [8, 128], strides = [1, 1]} : vector<16x128xf32> to vector<8x128xf32>
    %27 = math.tanh %26 : vector<8x128xf32>
    %28 = vector.extract_strided_slice %25 {offsets = [8, 0], sizes = [8, 128], strides = [1, 1]} : vector<16x128xf32> to vector<8x128xf32>
    %29 = arith.negf %28 : vector<8x128xf32>
    %30 = math.exp %29 : vector<8x128xf32>
    %cst_13 = arith.constant 1.000000e+00 : f32
    %31 = vector.broadcast %cst_13 : f32 to vector<8x128xf32>
    %32 = arith.addf %31, %30 : vector<8x128xf32>
    %33 = arith.divf %31, %32 : vector<8x128xf32>
    %34 = arith.mulf %27, %33 : vector<8x128xf32>
    %c0_14 = arith.constant 0 : index
    %c0_15 = arith.constant 0 : index
    %35 = vector.load %arg5[%c0_14, %c0_15] : memref<24x8xbf16, #tpu.memory_space<vmem>>, vector<24x8xbf16>
    %36 = arith.truncf %34 : vector<8x128xf32> to vector<8x128xbf16>
    %cst_16 = arith.constant dense<0.000000e+00> : vector<24x128xf32>
    %37 = tpu.matmul %35, %36, %cst_16 {dimension_numbers = #tpu.dot_dimension_numbers<[1], [0], [0], [1], [0, 0, 1, 1], [], []>} : vector<24x8xbf16>, vector<8x128xbf16>, vector<24x128xf32> -> vector<24x128xf32>
    %c0_17 = arith.constant 0 : index
    %c0_18 = arith.constant 0 : index
    %38 = vector.load %arg6[%c0_17, %c0_18] : memref<24x1xf32, #tpu.memory_space<vmem>>, vector<24x1xf32>
    %39 = vector.broadcast %38 : vector<24x1xf32> to vector<24x128xf32>
    %40 = arith.addf %37, %39 : vector<24x128xf32>
    %41 = vector.extract_strided_slice %40 {offsets = [0, 0], sizes = [8, 128], strides = [1, 1]} : vector<24x128xf32> to vector<8x128xf32>
    %42 = arith.addf %41, %7 : vector<8x128xf32>
    %c0_19 = arith.constant 0 : index
    %c0_20 = arith.constant 0 : index
    %c0_21 = arith.constant 0 : index
    %43 = vector.load %arg7[%c0_19, %c0_20, %c0_21] : memref<1x8x128xf32, #tpu.memory_space<vmem>>, vector<1x8x128xf32>
    %44 = vector.shape_cast %43 : vector<1x8x128xf32> to vector<8x128xf32>
    %45 = vector.shape_cast %42 : vector<8x128xf32> to vector<1x8x128xf32>
    tpu.vector_store %arg7[%c0_19, %c0_20, %c0_21], %45 {strides = array<i32>} : memref<1x8x128xf32, #tpu.memory_space<vmem>>, vector<1x8x128xf32>,
    %46 = vector.extract_strided_slice %40 {offsets = [8, 0], sizes = [16, 128], strides = [1, 1]} : vector<24x128xf32> to vector<16x128xf32>
    %c0_22 = arith.constant 0 : index
    %c0_23 = arith.constant 0 : index
    %c0_24 = arith.constant 0 : index
    %47 = vector.load %arg8[%c0_22, %c0_23, %c0_24] : memref<1x16x128xf32, #tpu.memory_space<vmem>>, vector<1x16x128xf32>
    %48 = vector.shape_cast %47 : vector<1x16x128xf32> to vector<16x128xf32>
    %49 = vector.shape_cast %46 : vector<16x128xf32> to vector<1x16x128xf32>
    tpu.vector_store %arg8[%c0_22, %c0_23, %c0_24], %49 {strides = array<i32>} : memref<1x16x128xf32, #tpu.memory_space<vmem>>, vector<1x16x128xf32>,
    return
  }
  func.func @transform_0(%arg0: i32) -> (i32, i32, i32) {
    %c0_i32 = arith.constant 0 : i32
    %c0_i32_0 = arith.constant 0 : i32
    %c0_i32_1 = arith.constant 0 : i32
    return %arg0, %c0_i32, %c0_i32_0 : i32, i32, i32
  }
  func.func @transform_1(%arg0: i32) -> (i32, i32) {
    %c0_i32 = arith.constant 0 : i32
    %c0_i32_0 = arith.constant 0 : i32
    %c0_i32_1 = arith.constant 0 : i32
    return %c0_i32, %c0_i32_0 : i32, i32
  }
  func.func @transform_2(%arg0: i32) -> (i32, i32) {
    %c0_i32 = arith.constant 0 : i32
    %c0_i32_0 = arith.constant 0 : i32
    %c0_i32_1 = arith.constant 0 : i32
    return %c0_i32, %c0_i32_0 : i32, i32
  }
  func.func @transform_3(%arg0: i32) -> (i32, i32) {
    %c0_i32 = arith.constant 0 : i32
    %c0_i32_0 = arith.constant 0 : i32
    %c0_i32_1 = arith.constant 0 : i32
    return %c0_i32, %c0_i32_0 : i32, i32
  }
  func.func @transform_4(%arg0: i32) -> (i32, i32) {
    %c0_i32 = arith.constant 0 : i32
    %c0_i32_0 = arith.constant 0 : i32
    %c0_i32_1 = arith.constant 0 : i32
    return %c0_i32, %c0_i32_0 : i32, i32
  }
  func.func @transform_5(%arg0: i32) -> (i32, i32) {
    %c0_i32 = arith.constant 0 : i32
    %c0_i32_0 = arith.constant 0 : i32
    %c0_i32_1 = arith.constant 0 : i32
    return %c0_i32, %c0_i32_0 : i32, i32
  }
  func.func @transform_6(%arg0: i32) -> (i32, i32, i32) {
    %c0_i32 = arith.constant 0 : i32
    %c0_i32_0 = arith.constant 0 : i32
    %c0_i32_1 = arith.constant 0 : i32
    return %arg0, %c0_i32, %c0_i32_0 : i32, i32, i32
  }
  func.func @transform_7(%arg0: i32) -> (i32, i32, i32) {
    %c0_i32 = arith.constant 0 : i32
    %c0_i32_0 = arith.constant 0 : i32
    %c0_i32_1 = arith.constant 0 : i32
    return %arg0, %c0_i32, %c0_i32_0 : i32, i32, i32
  }
}

</mosaic_0001>

<llo_original>
// kernel: tpu_custom_call.1
$region0: #{tpu_custom_call.1}
  #allocation0 [shape = 'u32[]', space=smem, size = 0x4, offset = 0x4, fixed_abs, tag = 'smem constant byte address 0x4 - core index']
  #allocation1 [shape = 'u32[144,128]{1,0:T(1,128)}', space=vmem, size = 0x12000, scoped, tag = 'internal scratch']
  %s0 = inlined_call_operand.vmem [shape: f32[2,8,128], index: 0, kind: input, shape index: {}]
  %s1 = inlined_call_operand.vmem [shape: f32[8,2], index: 1, kind: input, shape index: {}]
  %s2 = inlined_call_operand.vmem [shape: bf16[16,24], index: 2, kind: input, shape index: {}]
  %s3 = inlined_call_operand.vmem [shape: f32[16,1], index: 3, kind: input, shape index: {}]
  %s4 = inlined_call_operand.vmem [shape: bf16[24,8], index: 4, kind: input, shape index: {}]
  %s5 = inlined_call_operand.vmem [shape: f32[24,1], index: 5, kind: input, shape index: {}]
  %s6 = inlined_call_operand.hbm [shape: f32[2,8,128], index: 6, kind: output, shape index: {0}]
  %s7 = inlined_call_operand.hbm [shape: f32[2,16,128], index: 7, kind: output, shape index: {1}]
  %8 = xla_tuple %s6, %s7
  %s9 = sld [smem:[#allocation0]]
  $region65: #{tpu_custom_call.1} parent=0
    _
  %s11 = ssub.s32 1, %s9
  %s12 = scalar_select 0, %s11, %s9
  $region1: #{tpu_custom_call.1} parent=0
    #allocation2 [shape = 'u8[8192]{0}', space=vmem, size = 0x2000, scoped, tag = 'output window, operand 0']
    #allocation3 [shape = 's32[2]{0}', space=sflag, size = 0x8, scoped, tag = 'scoped memory for tpu_custom_call.1']
    #allocation4 [shape = 'u8[16384]{0}', space=vmem, size = 0x4000, scoped, tag = 'output window, operand 1']
    #allocation5 [shape = 's32[2]{0}', space=sflag, size = 0x8, scoped, tag = 'scoped memory for tpu_custom_call.1']
    %13 = vsyncpa [#allocation3], 0
    %s14 = scalar_lea.sflag [#allocation3], 1
    %15 = vsyncpa %s14, 0
    %16 = vsyncpa [#allocation5], 0
    %s17 = scalar_lea.sflag [#allocation5], 1
    %18 = vsyncpa %s17, 0
    loop: start=0, step=1, limit=4
    $region2: #{tpu_custom_call.1} parent=1 // loop_pre_header
      _
    $region3: #{tpu_custom_call.1} parent=1 // loop_header
      %s20 = sphi 0, %s24
      %p21 = scmp.ge.s32.totalorder %s20, 4
      %s30 = sphi 0, %s32
      %s33 = sphi 0, %s30
      %s34 = sphi 0, %s33
      %s50 = sphi 0, %s34
      %s54 = sphi 0, %s54
      %s56 = sphi 0, %s54
      %s57 = sphi 0, %s56
      %s71 = sphi 0, %s57
      %s75 = sphi 0, %s75
      %s77 = sphi 0, %s75
      %s78 = sphi 0, %s77
      %s92 = sphi 0, %s78
      %s96 = sphi 0, %s96
      %s98 = sphi 0, %s96
      %s99 = sphi 0, %s98
      %s113 = sphi 0, %s99
      %s117 = sphi 0, %s117
      %s119 = sphi 0, %s117
      %s120 = sphi 0, %s119
      %s134 = sphi 0, %s120
      %s138 = sphi 0, %s138
      %s140 = sphi 0, %s138
      %s141 = sphi 0, %s140
      %s155 = sphi 0, %s141
      %s161 = sphi 0, %s163
      %s164 = sphi 0, %s161
      %s165 = sphi 0, %s164
      %s181 = sphi 0, %s165
      %s187 = sphi 0, %s189
      %s190 = sphi 0, %s187
      %s191 = sphi 0, %s190
      %s207 = sphi 0, %s191
    $region4: #{tpu_custom_call.1} parent=1 // loop_header_branch
      %23 = sbr.rel (%p21) target = $region8
    $region5: #{tpu_custom_call.1} parent=1 // loop_body
      %s25 = ssub.s32 %s20, 1
      %s26 = ssub.s32 %s20, 2
      %s27 = sadd.s32 %s20, 1
      %s28 = ssub.s32 %s20, %s27
      %p29 = scmp.eq.s32.totalorder %s28, 0
      %s31 = sadd.s32 %s30, 1
      %s32 = scalar_select %p29, %s30, %s31
      %p35 = pneg %p29
      %p36 = scmp.eq.s32.totalorder %s20, 1
      %p37 = por %p35, %p36
      %p38 = scmp.ne.s32.totalorder %s30, %s33
      %p39 = scmp.eq.s32.totalorder %s20, 0
      %p40 = por %p38, %p39
      %p41 = scmp.ne.s32.totalorder %s30, %s33
      %p42 = scmp.eq.s32.totalorder %s25, 1
      %p43 = por %p41, %p42
      %p44 = scmp.ne.s32.totalorder %s33, %s34
      %p45 = scmp.eq.s32.totalorder %s25, 0
      %p46 = por %p44, %p45
      %p47 = scmp.ne.s32.totalorder %s33, %s34
      %p48 = scmp.eq.s32.totalorder %s26, 1
      %p49 = por %p47, %p48
      %p51 = scmp.ne.s32.totalorder %s34, %s50
      %p52 = scmp.eq.s32.totalorder %s26, 0
      %p53 = por %p51, %p52
      %s55 = sadd.s32 %s54, 1
      %p58 = scmp.eq.s32.totalorder %s20, 1
      %p59 = scmp.ne.s32.totalorder %s54, %s56
      %p60 = scmp.eq.s32.totalorder %s20, 0
      %p61 = por %p59, %p60
      %p62 = scmp.ne.s32.totalorder %s54, %s56
      %p63 = scmp.eq.s32.totalorder %s25, 1
      %p64 = por %p62, %p63
      %p65 = scmp.ne.s32.totalorder %s56, %s57
      %p66 = scmp.eq.s32.totalorder %s25, 0
      %p67 = por %p65, %p66
      %p68 = scmp.ne.s32.totalorder %s56, %s57
      %p69 = scmp.eq.s32.totalorder %s26, 1
      %p70 = por %p68, %p69
      %p72 = scmp.ne.s32.totalorder %s57, %s71
      %p73 = scmp.eq.s32.totalorder %s26, 0
      %p74 = por %p72, %p73
      %s76 = sadd.s32 %s75, 1
      %p79 = scmp.eq.s32.totalorder %s20, 1
      %p80 = scmp.ne.s32.totalorder %s75, %s77
      %p81 = scmp.eq.s32.totalorder %s20, 0
      %p82 = por %p80, %p81
      %p83 = scmp.ne.s32.totalorder %s75, %s77
      %p84 = scmp.eq.s32.totalorder %s25, 1
      %p85 = por %p83, %p84
      %p86 = scmp.ne.s32.totalorder %s77, %s78
      %p87 = scmp.eq.s32.totalorder %s25, 0
      %p88 = por %p86, %p87
      %p89 = scmp.ne.s32.totalorder %s77, %s78
      %p90 = scmp.eq.s32.totalorder %s26, 1
      %p91 = por %p89, %p90
      %p93 = scmp.ne.s32.totalorder %s78, %s92
      %p94 = scmp.eq.s32.totalorder %s26, 0
      %p95 = por %p93, %p94
      %s97 = sadd.s32 %s96, 1
      %p100 = scmp.eq.s32.totalorder %s20, 1
      %p101 = scmp.ne.s32.totalorder %s96, %s98
      %p102 = scmp.eq.s32.totalorder %s20, 0
      %p103 = por %p101, %p102
      %p104 = scmp.ne.s32.totalorder %s96, %s98
      %p105 = scmp.eq.s32.totalorder %s25, 1
      %p106 = por %p104, %p105
      %p107 = scmp.ne.s32.totalorder %s98, %s99
      %p108 = scmp.eq.s32.totalorder %s25, 0
      %p109 = por %p107, %p108
      %p110 = scmp.ne.s32.totalorder %s98, %s99
      %p111 = scmp.eq.s32.totalorder %s26, 1
      %p112 = por %p110, %p111
      %p114 = scmp.ne.s32.totalorder %s99, %s113
      %p115 = scmp.eq.s32.totalorder %s26, 0
      %p116 = por %p114, %p115
      %s118 = sadd.s32 %s117, 1
      %p121 = scmp.eq.s32.totalorder %s20, 1
      %p122 = scmp.ne.s32.totalorder %s117, %s119
      %p123 = scmp.eq.s32.totalorder %s20, 0
      %p124 = por %p122, %p123
      %p125 = scmp.ne.s32.totalorder %s117, %s119
      %p126 = scmp.eq.s32.totalorder %s25, 1
      %p127 = por %p125, %p126
      %p128 = scmp.ne.s32.totalorder %s119, %s120
      %p129 = scmp.eq.s32.totalorder %s25, 0
      %p130 = por %p128, %p129
      %p131 = scmp.ne.s32.totalorder %s119, %s120
      %p132 = scmp.eq.s32.totalorder %s26, 1
      %p133 = por %p131, %p132
      %p135 = scmp.ne.s32.totalorder %s120, %s134
      %p136 = scmp.eq.s32.totalorder %s26, 0
      %p137 = por %p135, %p136
      %s139 = sadd.s32 %s138, 1
      %p142 = scmp.eq.s32.totalorder %s20, 1
      %p143 = scmp.ne.s32.totalorder %s138, %s140
      %p144 = scmp.eq.s32.totalorder %s20, 0
      %p145 = por %p143, %p144
      %p146 = scmp.ne.s32.totalorder %s138, %s140
      %p147 = scmp.eq.s32.totalorder %s25, 1
      %p148 = por %p146, %p147
      %p149 = scmp.ne.s32.totalorder %s140, %s141
      %p150 = scmp.eq.s32.totalorder %s25, 0
      %p151 = por %p149, %p150
      %p152 = scmp.ne.s32.totalorder %s140, %s141
      %p153 = scmp.eq.s32.totalorder %s26, 1
      %p154 = por %p152, %p153
      %p156 = scmp.ne.s32.totalorder %s141, %s155
      %p157 = scmp.eq.s32.totalorder %s26, 0
      %p158 = por %p156, %p157
      %s159 = ssub.s32 %s20, %s27
      %p160 = scmp.eq.s32.totalorder %s159, 0
      %s162 = sadd.s32 %s161, 1
      %s163 = scalar_select %p160, %s161, %s162
      %p166 = pneg %p160
      %p167 = scmp.eq.s32.totalorder %s20, 1
      %p168 = por %p166, %p167
      %p169 = scmp.ne.s32.totalorder %s161, %s164
      %p170 = scmp.eq.s32.totalorder %s20, 0
      %p171 = por %p169, %p170
      %p172 = scmp.ne.s32.totalorder %s161, %s164
      %p173 = scmp.eq.s32.totalorder %s25, 1
      %p174 = por %p172, %p173
      %p175 = scmp.ne.s32.totalorder %s164, %s165
      %p176 = scmp.eq.s32.totalorder %s25, 0
      %p177 = por %p175, %p176
      %p178 = scmp.ne.s32.totalorder %s164, %s165
      %p179 = scmp.eq.s32.totalorder %s26, 1
      %p180 = por %p178, %p179
      %p182 = scmp.ne.s32.totalorder %s165, %s181
      %p183 = scmp.eq.s32.totalorder %s26, 0
      %p184 = por %p182, %p183
      %s185 = ssub.s32 %s20, %s27
      %p186 = scmp.eq.s32.totalorder %s185, 0
      %s188 = sadd.s32 %s187, 1
      %s189 = scalar_select %p186, %s187, %s188
      %p192 = pneg %p186
      %p193 = scmp.eq.s32.totalorder %s20, 1
      %p194 = por %p192, %p193
      %p195 = scmp.ne.s32.totalorder %s187, %s190
      %p196 = scmp.eq.s32.totalorder %s20, 0
      %p197 = por %p195, %p196
      %p198 = scmp.ne.s32.totalorder %s187, %s190
      %p199 = scmp.eq.s32.totalorder %s25, 1
      %p200 = por %p198, %p199
      %p201 = scmp.ne.s32.totalorder %s190, %s191
      %p202 = scmp.eq.s32.totalorder %s25, 0
      %p203 = por %p201, %p202
      %p204 = scmp.ne.s32.totalorder %s190, %s191
      %p205 = scmp.eq.s32.totalorder %s26, 1
      %p206 = por %p204, %p205
      %p208 = scmp.ne.s32.totalorder %s191, %s207
      %p209 = scmp.eq.s32.totalorder %s26, 0
      %p210 = por %p208, %p209
      %p211 = scmp.le.s32.totalorder 1, %s20
      %p212 = scmp.lt.s32.totalorder %s20, 3
      %p213 = pnand %p211, %p212
      %p214 = pneg %p213
      // Predicated region
      $region9: #{tpu_custom_call.1} parent=5 // pred_check
        _
      $region10: #{tpu_custom_call.1} parent=5 // pred_check_branch
        %216 = sbr.rel (%p213) target = $region12
      $region11: #{tpu_custom_call.1} parent=5 // pred_region
        %s217 = ssub.s32 %s20, 1
        // Predicated region
        $region13: #{tpu_custom_call.1} parent=11 // pred_check
          %p218 = pneg %p67
        $region14: #{tpu_custom_call.1} parent=11 // pred_check_branch
          %220 = sbr.rel (%p218) target = $region16
        $region15: #{tpu_custom_call.1} parent=11 // pred_region
          _
        $region16: #{tpu_custom_call.1} parent=11 // pred_fallthru
          _
        // Predicated region
        $region17: #{tpu_custom_call.1} parent=11 // pred_check
          %p221 = pneg %p88
        $region18: #{tpu_custom_call.1} parent=11 // pred_check_branch
          %223 = sbr.rel (%p221) target = $region20
        $region19: #{tpu_custom_call.1} parent=11 // pred_region
          _
        $region20: #{tpu_custom_call.1} parent=11 // pred_fallthru
          _
        // Predicated region
        $region21: #{tpu_custom_call.1} parent=11 // pred_check
          %p224 = pneg %p109
        $region22: #{tpu_custom_call.1} parent=11 // pred_check_branch
          %226 = sbr.rel (%p224) target = $region24
        $region23: #{tpu_custom_call.1} parent=11 // pred_region
          _
        $region24: #{tpu_custom_call.1} parent=11 // pred_fallthru
          _
        // Predicated region
        $region25: #{tpu_custom_call.1} parent=11 // pred_check
          %p227 = pneg %p130
        $region26: #{tpu_custom_call.1} parent=11 // pred_check_branch
          %229 = sbr.rel (%p227) target = $region28
        $region27: #{tpu_custom_call.1} parent=11 // pred_region
          _
        $region28: #{tpu_custom_call.1} parent=11 // pred_fallthru
          _
        // Predicated region
        $region29: #{tpu_custom_call.1} parent=11 // pred_check
          %p230 = pneg %p151
        $region30: #{tpu_custom_call.1} parent=11 // pred_check_branch
          %232 = sbr.rel (%p230) target = $region32
        $region31: #{tpu_custom_call.1} parent=11 // pred_region
          _
        $region32: #{tpu_custom_call.1} parent=11 // pred_fallthru
          _
      $region12: #{tpu_custom_call.1} parent=5 // pred_fallthru
        _
      %p233 = scmp.lt.s32.totalorder %s20, 2
      // Predicated region
      $region33: #{tpu_custom_call.1} parent=5 // pred_check
        %p234 = pneg %p233
      $region34: #{tpu_custom_call.1} parent=5 // pred_check_branch
        %236 = sbr.rel (%p234) target = $region36
      $region35: #{tpu_custom_call.1} parent=5 // pred_region
        // Predicated region
        $region37: #{tpu_custom_call.1} parent=35 // pred_check
          %p237 = pneg %p40
        $region38: #{tpu_custom_call.1} parent=35 // pred_check_branch
          %239 = sbr.rel (%p237) target = $region40
        $region39: #{tpu_custom_call.1} parent=35 // pred_region
          %p240 = scmp.lt.s32.totalorder %s20, 1
          %s241 = scalar_select %p240, %s20, 1
          %s242 = smul.addr %s241, 8
          %s243 = scalar_lea.vmem %s0, %s242
        $region40: #{tpu_custom_call.1} parent=35 // pred_fallthru
          _
      $region36: #{tpu_custom_call.1} parent=5 // pred_fallthru
        _
      %p244 = scmp.le.s32.totalorder 1, %s20
      %p245 = scmp.lt.s32.totalorder %s20, 3
      %p246 = pnand %p244, %p245
      %p247 = pneg %p246
      // Predicated region
      $region41: #{tpu_custom_call.1} parent=5 // pred_check
        _
      $region42: #{tpu_custom_call.1} parent=5 // pred_check_branch
        %249 = sbr.rel (%p246) target = $region44
      $region43: #{tpu_custom_call.1} parent=5 // pred_region
        %s250 = ssub.s32 %s20, 1
        %p251 = scmp.lt.s32.totalorder %s25, 1
        %s252 = scalar_select %p251, %s25, 1
        %s253 = smul.addr %s252, 8
        %s254 = scalar_lea.vmem %s0, %s253
        %p255 = pneg %p46
        %p256 = pneg %p43
        %p257 = pneg %p67
        %p258 = pneg %p64
        %p259 = pneg %p88
        %p260 = pneg %p85
        %p261 = pneg %p109
        %p262 = pneg %p106
        %p263 = pneg %p130
        %p264 = pneg %p127
        %p265 = pneg %p151
        %p266 = pneg %p148
        %p267 = pneg %p177
        %p268 = pneg %p174
        %s269 = sand.u32 %s164, 1
        %s270 = scalar_lea.sflag [#allocation3], %s269
        %s271 = sand.u32 %s164, 1
        %s272 = smul.addr %s271, 8
        %s273 = scalar_lea.vmem [#allocation2], %s272
        %p274 = pneg %p203
        %p275 = pneg %p200
        %s276 = sand.u32 %s190, 1
        %s277 = scalar_lea.sflag [#allocation5], %s276
        %s278 = sand.u32 %s190, 1
        %s279 = smul.addr %s278, 16
        %s280 = scalar_lea.vmem [#allocation4], %s279
        %p281 = scmp.lt.s32.totalorder %s25, 1
        %s282 = scalar_select %p281, %s25, 1
        %s283 = smul.addr %s282, 8
        %s284 = scalar_lea.vmem %s0, %s283
        %v286 = vld [vmem:[%s284] sm:$0xff]
        %v287 = vld [vmem:[%s1] sm:$0xff]
        %289 = vset.pattern.permute.xlu0 0
        %290 = vperm.xlu0 %289, %v287
        %v291 = vpop.permute.xlu0 %290
        %v293 = vmul.f32 %v286, %v291
        %294 = vset.pattern.permute.xlu0 1
        %295 = vperm.xlu0 %294, %v287
        %v296 = vpop.permute.xlu0 %295
        %v298 = vadd.f32 %v293, %v296
        %v299 = vlaneseq
        %v300 = vand.u32 %v299, 127
        %301 = vrot.lane.b32.xlu0 %v298, 4
        %v302 = vpop.permute.xlu0 %301
        %vm303 = vcmp.ge.s32.totalorder %v300, 4
        %v304 = vsel %vm303, %v302, 0.0
        %305 = vrot.lane.b32.xlu0 %v298, 2
        %v306 = vpop.permute.xlu0 %305
        %vm307 = vcmp.ge.s32.totalorder %v300, 2
        %v308 = vsel %vm307, %v306, 0.0
        %v309 = vld [vmem:[%s2] sm:$0xf]
        %v310 = vld [vmem:[%s2 + $0x4] sm:$0xf]
        %v311 = vpack.c.bf16 %v308, %v304
        %v312 = vpack.c.bf16 %v298, %v298
        %v313 = vld [vmem:[%s3] sm:$0xff]
        %v314 = vld [vmem:[%s3 + $0x8] sm:$0xff]
        %316 = vset.pattern.permute.xlu0 0
        %317 = vperm.xlu0 %316, %v313
        %v318 = vpop.permute.xlu0 %317
        %321 = vset.pattern.permute.xlu0 0
        %322 = vperm.xlu0 %321, %v314
        %v323 = vpop.permute.xlu0 %322
        %v327 = vunpack.c.l.b16 %v309
        %v328 = vunpack.c.l.b16 %v310
        %v329 = vpack.c.b16 %v328, %v327
        %vm330 = vcmask 195584
        %v332 = vsel %vm330, %v329, 0
        %vm334 = vcmask 1043456
        %v336 = vsel %vm334, %v312, 0
        %338 = vmatprep.subr.bf16.mxu0 0
        %339 = vmatpush1.bf16.msra.mxu0 %v311
        %340 = vmatprep.subr.bf16.mxu0 0
        %341 = vmatpush1.bf16.msra.mxu0 %v336
        %342 = vmatprep.subr.bf16.mxu0 0
        %343 = vmatpush1.bf16.msra.mxu0 0
        %344 = vmatprep.subr.bf16.mxu0 0
        %345 = vmatpush1.bf16.msra.mxu0 0
        %346 = vmatprep.subr.bf16.mxu0 0
        %347 = vmatpush1.bf16.msra.mxu0 0
        %348 = vmatprep.subr.bf16.mxu0 0
        %349 = vmatpush1.bf16.msra.mxu0 0
        %350 = vmatprep.subr.bf16.mxu0 0
        %351 = vmatpush1.bf16.msra.mxu0 0
        %352 = vmatprep.subr.bf16.mxu0 0
        %353 = vmatpush1.bf16.msra.mxu0 0
        %354 = vmatprep.subr.bf16.mxu0 0
        %355 = vmatpush1.bf16.msra.mxu0 0
        %356 = vmatprep.subr.bf16.mxu0 0
        %357 = vmatpush1.bf16.msra.mxu0 0
        %358 = vmatprep.subr.bf16.mxu0 0
        %359 = vmatpush1.bf16.msra.mxu0 0
        %360 = vmatprep.subr.bf16.mxu0 0
        %361 = vmatpush1.bf16.msra.mxu0 0
        %362 = vmatprep.subr.bf16.mxu0 0
        %363 = vmatpush1.bf16.msra.mxu0 0
        %364 = vmatprep.subr.bf16.mxu0 0
        %365 = vmatpush1.bf16.msra.mxu0 0
        %366 = vmatprep.subr.bf16.mxu0 0
        %367 = vmatpush1.bf16.msra.mxu0 0
        %368 = vmatprep.subr.bf16.mxu0 0
        %369 = vmatpush1.bf16.msra.mxu0 0
        %370 = vmatprep.mubr.bf16.mxu0 0
        %371 = vmatmul.mubr.bf16.gmra.mrb[0].mxu0 %v332
        %v372 = vpop.f32.mrb[0].mxu0
        %v373 = vadd.f32 %v318, %v372
        %v374 = vpop.f32.mrb[0].mxu0
        %v375 = vpop.f32.mrb[0].mxu0
        %v376 = vadd.f32 %v323, %v375
        %v377 = vpop.f32.mrb[0].mxu0
        %378 = vdwg.mxu0
        %v379 = vtanh.pop %v373
        %v380 = vxor.u32 %v376, 2147483648
        %v381 = vmul.f32 %v380, 1.442695
        %v382 = vpow.pop %v381
        %v383 = vadd.f32 %v382, 1.0
        %v384 = vrcp.pop %v383
        %v385 = vmul.f32 1.0, %v384
        %v386 = vmul.f32 %v379, %v385
        %v387 = vld [vmem:[%s4] sm:$0xf]
        %v388 = vld [vmem:[%s4 + $0x4] sm:$0xf]
        %v389 = vld [vmem:[%s4 + $0x8] sm:$0xf]
        %v390 = vpack.c.bf16 %v386, %v386
        %v391 = vld [vmem:[%s5] sm:$0xff]
        %v392 = vld [vmem:[%s5 + $0x8] sm:$0xff]
        %v393 = vld [vmem:[%s5 + $0x10] sm:$0xff]
        %395 = vset.pattern.permute.xlu0 0
        %396 = vperm.xlu0 %395, %v391
        %v397 = vpop.permute.xlu0 %396
        %400 = vset.pattern.permute.xlu0 0
        %401 = vperm.xlu0 %400, %v392
        %v402 = vpop.permute.xlu0 %401
        %405 = vset.pattern.permute.xlu0 0
        %406 = vperm.xlu0 %405, %v393
        %v407 = vpop.permute.xlu0 %406
        %v412 = vunpack.c.l.b16 %v387
        %v413 = vunpack.c.l.b16 %v388
        %v414 = vunpack.c.l.b16 %v389
        %v415 = vpack.c.b16 %v413, %v412
        %v416 = vpack.c.b16 %v414, %v414
        %vm417 = vcmask 64512
        %v419 = vsel %vm417, %v415, 0
        %v422 = vsel %vm417, %v416, 0
        %v425 = vsel %vm334, %v390, 0
        %427 = vmatprep.subr.bf16.mxu0 0
        %428 = vmatpush1.bf16.msra.mxu0 %v425
        %429 = vmatprep.subr.bf16.mxu0 0
        %430 = vmatpush1.bf16.msra.mxu0 0
        %431 = vmatprep.subr.bf16.mxu0 0
        %432 = vmatpush1.bf16.msra.mxu0 0
        %433 = vmatprep.subr.bf16.mxu0 0
        %434 = vmatpush1.bf16.msra.mxu0 0
        %435 = vmatprep.subr.bf16.mxu0 0
        %436 = vmatpush1.bf16.msra.mxu0 0
        %437 = vmatprep.subr.bf16.mxu0 0
        %438 = vmatpush1.bf16.msra.mxu0 0
        %439 = vmatprep.subr.bf16.mxu0 0
        %440 = vmatpush1.bf16.msra.mxu0 0
        %441 = vmatprep.subr.bf16.mxu0 0
        %442 = vmatpush1.bf16.msra.mxu0 0
        %443 = vmatprep.subr.bf16.mxu0 0
        %444 = vmatpush1.bf16.msra.mxu0 0
        %445 = vmatprep.subr.bf16.mxu0 0
        %446 = vmatpush1.bf16.msra.mxu0 0
        %447 = vmatprep.subr.bf16.mxu0 0
        %448 = vmatpush1.bf16.msra.mxu0 0
        %449 = vmatprep.subr.bf16.mxu0 0
        %450 = vmatpush1.bf16.msra.mxu0 0
        %451 = vmatprep.subr.bf16.mxu0 0
        %452 = vmatpush1.bf16.msra.mxu0 0
        %453 = vmatprep.subr.bf16.mxu0 0
        %454 = vmatpush1.bf16.msra.mxu0 0
        %455 = vmatprep.subr.bf16.mxu0 0
        %456 = vmatpush1.bf16.msra.mxu0 0
        %457 = vmatprep.subr.bf16.mxu0 0
        %458 = vmatpush1.bf16.msra.mxu0 0
        %459 = vmatprep.mubr.bf16.mxu0 0
        %460 = vmatmul.mubr.bf16.gmra.mrb[0].mxu0 %v419
        %v461 = vpop.f32.mrb[0].mxu0
        %v462 = vadd.f32 %v397, %v461
        %v463 = vpop.f32.mrb[0].mxu0
        %v464 = vpop.f32.mrb[0].mxu0
        %v465 = vadd.f32 %v402, %v464
        %v466 = vpop.f32.mrb[0].mxu0
        %467 = vmatprep.mubr.bf16.mxu0 0
        %468 = vmatmul.mubr.bf16.gmra.mrb[0].mxu0 %v422
        %v469 = vpop.f32.mrb[0].mxu0
        %v470 = vadd.f32 %v407, %v469
        %v471 = vpop.f32.mrb[0].mxu0
        %v472 = vpop.f32.mrb[0].mxu0
        %v473 = vpop.f32.mrb[0].mxu0
        %474 = vdwg.mxu0
        %v475 = vadd.f32 %v462, %v298
        %476 = vst [vmem:[%s273] sm:$0xff] %v475
        %477 = vst [vmem:[%s280] sm:$0xff] %v465
        %478 = vst [vmem:[%s280 + $0x8] sm:$0xff] %v470
        %s479 = sand.u32 %s164, 1
        %s480 = scalar_lea.sflag [#allocation3], %s479
        %s481 = sand.u32 %s164, 1
        %s482 = smul.addr %s481, 8
        %s483 = scalar_lea.vmem [#allocation2], %s482
        %s484 = sand.u32 %s190, 1
        %s485 = scalar_lea.sflag [#allocation5], %s484
        %s486 = sand.u32 %s190, 1
        %s487 = smul.addr %s486, 16
        %s488 = scalar_lea.vmem [#allocation4], %s487
        // Predicated region
        $region45: #{tpu_custom_call.1} parent=43 // pred_check
          %p489 = pneg %p174
        $region46: #{tpu_custom_call.1} parent=43 // pred_check_branch
          %491 = sbr.rel (%p489) target = $region48
        $region47: #{tpu_custom_call.1} parent=43 // pred_region
          %s493 = ssub.s32 128, 128
          %494 = vsyncadd %s480, %s493
          %s495 = smul.addr %s25, 128
          %s496 = scalar_lea.hbm %s6, %s495
          %s498 = sshll.u32 %s483, 4
          %s499 = int_to_ptr.vmem [resolvable:$true] %s498
          %501 = dma.vmem_to_hbm [thread:$0]  %s499, 128, %s496, %s480
        $region48: #{tpu_custom_call.1} parent=43 // pred_fallthru
          _
        // Predicated region
        $region49: #{tpu_custom_call.1} parent=43 // pred_check
          %p502 = pneg %p200
        $region50: #{tpu_custom_call.1} parent=43 // pred_check_branch
          %504 = sbr.rel (%p502) target = $region52
        $region51: #{tpu_custom_call.1} parent=43 // pred_region
          %s506 = ssub.s32 256, 256
          %507 = vsyncadd %s485, %s506
          %s508 = smul.addr %s25, 2
          %s509 = smul.addr %s508, 128
          %s510 = scalar_lea.hbm %s7, %s509
          %s511 = sshll.u32 %s488, 4
          %s512 = int_to_ptr.vmem [resolvable:$true] %s511
          %517 = dma.vmem_to_hbm [thread:$0]  %s512, 256, %s510, %s485, 128, 128, 8
        $region52: #{tpu_custom_call.1} parent=43 // pred_fallthru
          _
      $region44: #{tpu_custom_call.1} parent=5 // pred_fallthru
        _
      %p518 = scmp.le.s32.totalorder 2, %s20
      // Predicated region
      $region53: #{tpu_custom_call.1} parent=5 // pred_check
        %p519 = pneg %p518
      $region54: #{tpu_custom_call.1} parent=5 // pred_check_branch
        %521 = sbr.rel (%p519) target = $region56
      $region55: #{tpu_custom_call.1} parent=5 // pred_region
        %s522 = ssub.s32 %s20, 2
        // Predicated region
        $region57: #{tpu_custom_call.1} parent=55 // pred_check
          %p523 = pneg %p180
        $region58: #{tpu_custom_call.1} parent=55 // pred_check_branch
          %525 = sbr.rel (%p523) target = $region60
        $region59: #{tpu_custom_call.1} parent=55 // pred_region
          %s526 = sand.u32 %s165, 1
          %s527 = scalar_lea.sflag [#allocation3], %s526
          %s528 = sand.u32 %s165, 1
          %s529 = smul.addr %s528, 8
          %s530 = scalar_lea.vmem [#allocation2], %s529
          %531 = dma.done %s527, 128
        $region60: #{tpu_custom_call.1} parent=55 // pred_fallthru
          _
        // Predicated region
        $region61: #{tpu_custom_call.1} parent=55 // pred_check
          %p532 = pneg %p206
        $region62: #{tpu_custom_call.1} parent=55 // pred_check_branch
          %534 = sbr.rel (%p532) target = $region64
        $region63: #{tpu_custom_call.1} parent=55 // pred_region
          %s535 = sand.u32 %s191, 1
          %s536 = scalar_lea.sflag [#allocation5], %s535
          %s537 = sand.u32 %s191, 1
          %s538 = smul.addr %s537, 16
          %s539 = scalar_lea.vmem [#allocation4], %s538
          %540 = dma.done %s536, 256
        $region64: #{tpu_custom_call.1} parent=55 // pred_fallthru
          _
      $region56: #{tpu_custom_call.1} parent=5 // pred_fallthru
        _
    $region6: #{tpu_custom_call.1} parent=1 // loop_footer
      %s24 = sadd.s32 1, %s20
    $region7: #{tpu_custom_call.1} parent=1 // loop_footer_branch
      %19 = sbr.rel target = $region3
    $region8: #{tpu_custom_call.1} parent=1 // loop_exit
      _
    %541 = vsyncpa [#allocation3], 1
    %s542 = scalar_lea.sflag [#allocation3], 1
    %543 = vsyncpa %s542, 1
    %544 = vsyncpa [#allocation5], 1
    %s545 = scalar_lea.sflag [#allocation5], 1
    %546 = vsyncpa %s545, 1

</llo_original>
